<compile_context>
chip_gen: v7x
topology: tpu7x:2x2x1
jax: 0.10.0
libtpu: 0.0.40
codegen_flags: <defaults>
</compile_context>

<pallas_src>
import jax
import jax.numpy as jnp
from jax.experimental import pallas as pl
from jax.experimental.pallas import tpu as pltpu

LANE = 128                             # vreg lane width
SUBLANE = 8                            # f32 sublane count
TARGET_BLOCK_BYTES = 2 * 1024 * 1024   # ~2 MiB row tiles: amortize ~0.35us/step overhead,
                                       # and 3 arrays x 2 buffers stays ~12 MiB << VMEM budget
VMEM_LIMIT_BYTES = 48 * 1024 * 1024    # > 32 MiB default (v6e), <= v7x's 64 MiB physical VMEM
TINY_BYTES = 32 * 1024                 # below this a single whole-array block wins


def build_encoding(d_model: int, max_len: int = 60) -> jnp.ndarray:
    """Replicates PositionalEncoding.__init__ exactly. Returns (1, max_len, d_model) f32."""
    position = jnp.arange(0, max_len, dtype=jnp.float32)[:, None]            # (max_len, 1)
    div_term = jnp.exp(
        jnp.arange(0, d_model, 2, dtype=jnp.float32)
        * -(jnp.log(jnp.float32(10000.0)) / d_model)
    )                                                                        # (ceil(d/2),)
    enc = jnp.zeros((max_len, d_model), dtype=jnp.float32)
    enc = enc.at[:, 0::2].set(jnp.sin(position * div_term))
    if d_model % 2:
        enc = enc.at[:, 1::2].set(jnp.cos(position * div_term)[:, :-1])
    else:
        enc = enc.at[:, 1::2].set(jnp.cos(position * div_term))
    return enc[None]                                                         # (1, max_len, d_model)


def _pe_add_tiled_kernel(x_ref, enc_ref, o_ref):
    # x_ref/o_ref: (1, TR, 128); enc_ref: (TR, 128) -> broadcast over leading batch dim.
    o_ref[...] = x_ref[...] + enc_ref[...]


def _pe_add_full_kernel(x_ref, enc_ref, o_ref):
    # x_ref/o_ref: (B, S, D); enc_ref: (S, D).
    o_ref[...] = x_ref[...] + enc_ref[...]


def _pick_row_tile(num_rows: int, itemsize: int) -> int:
    """Largest row tile (sublane-aligned, dividing num_rows) under the ~2 MiB target."""
    sub = SUBLANE * max(1, 4 // itemsize)          # 8 for f32, 16 for bf16, 32 for int8
    tr_max = max(sub, (TARGET_BLOCK_BYTES // (LANE * itemsize)) // sub * sub)
    if num_rows <= tr_max:
        return num_rows                             # full extent is always a legal block dim
    for tr in range(tr_max, sub - 1, -sub):
        if num_rows % tr == 0:
            return tr
    return num_rows                                 # no aligned divisor: fall back to full rows


def _forward_impl(x: jnp.ndarray, encoding: jnp.ndarray) -> jnp.ndarray:
    """x: (B, S, D); encoding: (1, max_len, D). Returns x + encoding[:, :S]."""
    B, S, D = x.shape
    enc = encoding[0, :S, :].astype(x.dtype)        # (S, D) — static slice, stays in JAX
    N = S * D
    total_bytes = B * N * x.dtype.itemsize

    # Tiny or lane-ragged problems: one whole-array block, no grid.
    if total_bytes < TINY_BYTES or N % LANE != 0:
        # TODO(synk): very large inputs with S*D not a multiple of 128 would need padding to
        # take the lane-dense tiled path; they currently fall through to this single block.
        return pl.pallas_call(
            _pe_add_full_kernel,
            out_shape=jax.ShapeDtypeStruct((B, S, D), x.dtype),
        )(x, enc)

    # Lane-dense tiled path: each (S, D) row flattened to R x 128.
    R = N // LANE
    TR = _pick_row_tile(R, x.dtype.itemsize)
    x3 = x.reshape(B, R, LANE)
    enc3 = enc.reshape(R, LANE)

    # Encoding-varying axis OUTER, batch INNER: the encoding block index is unchanged across
    # consecutive batch steps, so Pallas skips re-fetching it B times.
    grid = (R // TR, B)

    out3 = pl.pallas_call(
        _pe_add_tiled_kernel,
        out_shape=jax.ShapeDtypeStruct((B, R, LANE), x.dtype),
        grid=grid,
        in_specs=[
            pl.BlockSpec((1, TR, LANE), lambda r, b: (b, r, 0)),   # x row tile
            pl.BlockSpec((TR, LANE), lambda r, b: (r, 0)),         # shared PE tile (outer-only)
        ],
        out_specs=pl.BlockSpec((1, TR, LANE), lambda r, b: (b, r, 0)),
        input_output_aliases={0: 0},                               # write sum in place of x
        compiler_params=pltpu.CompilerParams(
            # Row-tile axis 'parallel' -> v7x's two TensorCores each stream tiles;
            # batch axis sequential to preserve encoding-block reuse.
            dimension_semantics=("parallel", "arbitrary"),
            vmem_limit_bytes=VMEM_LIMIT_BYTES,
        ),
    )(x3, enc3)
    return out3.reshape(B, S, D)


positional_encoding_forward = jax.jit(_forward_impl)


if __name__ == "__main__":
    key = jax.random.PRNGKey(0)
    max_len = 60

    def check(B, S, D):
        k = jax.random.fold_in(key, B * 10000 + S * 100 + D)
        x = jax.random.normal(k, (B, S, D), dtype=jnp.float32)
        encoding = build_encoding(D, max_len)        # deterministic "parameter" init
        ref = x + encoding[:, :S]                    # reference computed before the kernel
        out = positional_encoding_forward(x, encoding)
        out = jax.block_until_ready(out)
        assert out.shape == (B, S, D)
        assert jnp.allclose(out, ref, atol=1e-6), f"mismatch vs reference at B={B},S={S},D={D}"

    check(2, 8, 32)    # tiny shape -> single whole-array block path
    check(4, 48, 64)   # lane-dense tiled path: N=3072 -> (R=24, 128) blocks, grid=(1, 4)
    check(2, 8, 33)    # odd d_model -> exercises cos[:, :-1] init + fallback path

    print("KERNEL_OK")
</pallas_src>

<mosaic_0001>
module attributes {stable_mosaic.version = 11 : i64} {
  func.func @_pe_add_full_kernel(%arg0: memref<2x8x32xf32, #tpu.memory_space<vmem>>, %arg1: memref<8x32xf32, #tpu.memory_space<vmem>>, %arg2: memref<2x8x32xf32, #tpu.memory_space<vmem>>) attributes {dimension_semantics = [], scalar_prefetch = 0 : i64, scratch_operands = 0 : i64, tpu.core_type = #tpu.core_type<tc>} {
    %c0 = arith.constant 0 : index
    %c0_0 = arith.constant 0 : index
    %c0_1 = arith.constant 0 : index
    %0 = vector.load %arg0[%c0, %c0_0, %c0_1] : memref<2x8x32xf32, #tpu.memory_space<vmem>>, vector<2x8x32xf32>
    %c0_2 = arith.constant 0 : index
    %c0_3 = arith.constant 0 : index
    %1 = vector.load %arg1[%c0_2, %c0_3] : memref<8x32xf32, #tpu.memory_space<vmem>>, vector<8x32xf32>
    %2 = vector.shape_cast %1 : vector<8x32xf32> to vector<1x8x32xf32>
    %3 = vector.broadcast %2 : vector<1x8x32xf32> to vector<2x8x32xf32>
    %4 = arith.addf %0, %3 : vector<2x8x32xf32>
    %c0_4 = arith.constant 0 : index
    %c0_5 = arith.constant 0 : index
    %c0_6 = arith.constant 0 : index
    %5 = vector.load %arg2[%c0_4, %c0_5, %c0_6] : memref<2x8x32xf32, #tpu.memory_space<vmem>>, vector<2x8x32xf32>
    tpu.vector_store %arg2[%c0_4, %c0_5, %c0_6], %4 {strides = array<i32>} : memref<2x8x32xf32, #tpu.memory_space<vmem>>, vector<2x8x32xf32>,
    return
  }
}

</mosaic_0001>

<llo_original>
// kernel: _forward_impl.1
$region0: #{_forward_impl.1}
  #allocation0 [shape = 'u32[]', space=smem, size = 0x4, offset = 0x4, fixed_abs, tag = 'smem constant byte address 0x4 - core index']
  #allocation1 [shape = 'u32[144,128]{1,0:T(1,128)}', space=vmem, size = 0x12000, scoped, tag = 'internal scratch']
  %s0 = inlined_call_operand.vmem [shape: f32[2,8,32], index: 0, kind: input, shape index: {}]
  %s1 = inlined_call_operand.vmem [shape: f32[8,32], index: 1, kind: input, shape index: {}]
  %s2 = inlined_call_operand.hbm [shape: f32[2,8,32], index: 2, kind: output, shape index: {}]
  %s3 = sld [smem:[#allocation0]]
  $region18: #{_forward_impl.1} parent=0
    _
  %s5 = ssub.s32 1, %s3
  %s6 = scalar_select 0, %s5, %s3
  $region1: #{_forward_impl.1} parent=0
    #allocation2 [shape = 'u8[8192]{0}', space=vmem, size = 0x2000, scoped, tag = 'output window, operand 0, single buffered']
    #allocation3 [shape = 's32[1]{0}', space=sflag, size = 0x4, scoped, tag = 'scoped memory for _forward_impl.1']
    %7 = vsyncpa [#allocation3], 0
    // Predicated region
    $region2: #{_forward_impl.1} parent=1 // pred_check
      _
    $region3: #{_forward_impl.1} parent=1 // pred_check_branch
      %9 = sbr.rel (0) target = $region5
    $region4: #{_forward_impl.1} parent=1 // pred_region
      _
    $region5: #{_forward_impl.1} parent=1 // pred_fallthru
      _
    // Predicated region
    $region6: #{_forward_impl.1} parent=1 // pred_check
      _
    $region7: #{_forward_impl.1} parent=1 // pred_check_branch
      %11 = sbr.rel (0) target = $region9
    $region8: #{_forward_impl.1} parent=1 // pred_region
      _
    $region9: #{_forward_impl.1} parent=1 // pred_fallthru
      _
    %v12 = vld [vmem:[%s0] sm:$0xff]
    %v13 = vld [vmem:[%s0 + $0x8] sm:$0xff]
    %v14 = vld [vmem:[%s1] sm:$0xff]
    %v15 = vadd.f32 %v12, %v14
    %v16 = vadd.f32 %v13, %v14
    %vm17 = vcmask 261120
    %18 = vst.msk [vmem:[#allocation2] sm:$0xff] %vm17, %v15
    %19 = vst.msk [vmem:[#allocation2 + $0x8] sm:$0xff] %vm17, %v16
    // Predicated region
    $region10: #{_forward_impl.1} parent=1 // pred_check
      _
    $region11: #{_forward_impl.1} parent=1 // pred_check_branch
      %21 = sbr.rel (0) target = $region13
    $region12: #{_forward_impl.1} parent=1 // pred_region
      %s23 = ssub.s32 256, 256
      %24 = vsyncadd [#allocation3], %s23
      %s25 = sshll.u32 [#allocation2], 4
      %s26 = int_to_ptr.vmem [resolvable:$true] %s25
      %31 = dma.vmem_to_hbm [thread:$0]  %s26, 256, %s2, [#allocation3], 128, 128, 8
    $region13: #{_forward_impl.1} parent=1 // pred_fallthru
      _
    // Predicated region
    $region14: #{_forward_impl.1} parent=1 // pred_check
      _
    $region15: #{_forward_impl.1} parent=1 // pred_check_branch
      %33 = sbr.rel (0) target = $region17
    $region16: #{_forward_impl.1} parent=1 // pred_region
      %34 = dma.done [#allocation3], 256
    $region17: #{_forward_impl.1} parent=1 // pred_fallthru
      _
    %35 = vsyncpa [#allocation3], 1

</llo_original>
